<compile_context>
chip_gen: v7x
topology: tpu7x:2x2x1
jax: 0.10.0
libtpu: 0.0.40
codegen_flags: <defaults>
</compile_context>

<pallas_src>
import jax
import jax.numpy as jnp
import numpy as np
from jax.experimental import pallas as pl
from jax.experimental.pallas import tpu as pltpu

HIDDEN = 32        # hidden_size
NUM_INPUTS = 20    # num_inputs: 16 CNN-derived features + 4 passthrough features
NUM_OUTPUTS = 4    # action_space.shape[0]
BATCH = 2          # forced to 2 by view(1, 2, 8) on inputs[:, 0:8]
BN_EPS = 1e-5

CONV_IN = 16             # lanes of `inputs` that feed the two conv branches
CONV_COLS = 192          # 2 branches * 6 conv time positions * 16 out channels
CONV_BLOCK = 256         # lane-aligned stride between the ch0 / ch1 column blocks
POOL_COLS = 96           # after MaxPool1d(2): 2 branches * 3 positions * 16 ch
OUTY_COLS = 2 * NUM_INPUTS   # 40: head output laid out as [x_row0(20) | x_row1(20)]

# Parameter-slab layout: 128 lanes wide (one lane tile); matrices start on
# 8-aligned rows at column 0 so every MXU operand is an aligned slice.
ROW_BCONV = 0            # conv bias in post-pool form, 96 lanes
ROW_BOUT = 1             # head bias, 40 lanes
ROW_B1 = 2               # linear1 bias (+ folded bn0 beta contribution), 32 lanes
ROW_B2 = 3               # linear2 bias, 32 lanes
ROW_BMU = 4              # mu bias, 4 lanes
ROW_WOUT = 8             # 96 rows: block-diag pooled -> (2x16) head weight, 40 cols
ROW_W1 = 104             # 20 rows: linear1 weight with bn0 gamma folded in, 32 cols
ROW_W2 = 128             # 32 rows: linear2 weight, 32 cols
ROW_WMU = 160            # 32 rows: mu weight, 4 cols
SLAB_ROWS = 192
SLAB_COLS = 128


def actor_kernel(x_ref, wconv_ref, slab_ref, out_ref):
    f32 = jnp.float32
    x = x_ref[...]                                                    # (2, 20)

    # --- Both Conv1d(2->16, k=4, pad=1) branches as one MXU push on the first
    # 16 raw input lanes.  Columns [0,256) hold the taps applied to input row 0
    # (conv channel 0), [256,448) those applied to row 1; sum the two partials.
    c2 = jnp.dot(x[:, 0:CONV_IN], wconv_ref[...],
                 preferred_element_type=f32)                          # (2, 512)
    conv = (c2[0:1, 0:CONV_COLS]
            + c2[1:2, CONV_BLOCK:CONV_BLOCK + CONV_COLS])             # (1, 192)
    # MaxPool1d(k=2, s=2) then bias then ReLU.  Equivalent to the module's
    # conv-bias -> ReLU -> MaxPool because the bias is shared by both pooled
    # elements and relu/max commute:  max(relu(a+b), relu(c+b)) ==
    # relu(max(a, c) + b).  Columns [0,96) are the even-t block, [96,192) odd-t
    # (t=6 is dropped by the pool and never computed).
    pooled = jnp.maximum(
        jnp.maximum(conv[:, 0:POOL_COLS], conv[:, POOL_COLS:CONV_COLS])
        + slab_ref[ROW_BCONV:ROW_BCONV + 1, 0:POOL_COLS],
        0.0)                                                          # (1, 96)

    # --- Both Linear(48,16) heads as one block-diagonal matmul; columns are
    # pre-permuted so y = [x_row0(20) | x_row1(20)] with zeros in the 4
    # passthrough lanes of each half.
    y = (jnp.dot(pooled, slab_ref[ROW_WOUT:ROW_WOUT + 96, 0:OUTY_COLS],
                 preferred_element_type=f32)
         + slab_ref[ROW_BOUT:ROW_BOUT + 1, 0:OUTY_COLS])              # (1, 40)

    # torch: cnn1.view(2,8), cnn2.view(2,8), cat(..., inputs[:,16:]) -> (2, 20)
    # Built as a register value (row-select + masked passthrough), no scratch.
    row_idx = jax.lax.broadcasted_iota(jnp.int32, (BATCH, NUM_INPUTS), 0)
    col_idx = jax.lax.broadcasted_iota(jnp.int32, (BATCH, NUM_INPUTS), 1)
    cnn = jnp.where(row_idx == 0,
                    y[:, 0:NUM_INPUTS], y[:, NUM_INPUTS:2 * NUM_INPUTS])
    xc = cnn + jnp.where(col_idx >= 16, x, 0.0)                       # (2, 20)

    # --- BatchNorm1d in training mode: biased batch statistics over the 2 rows.
    # gamma / beta are folded into linear1's weight & bias at pack time, so only
    # the data-dependent normalization happens here.
    # TODO(synk): running_mean / running_var buffer updates (training-time side
    # effect) are not reproduced; only the normalization math is.
    mean = jnp.mean(xc, axis=0, keepdims=True)
    d = xc - mean
    var = jnp.mean(d * d, axis=0, keepdims=True)
    xn = d * jax.lax.rsqrt(var + BN_EPS)

    h1 = jnp.tanh(jnp.dot(xn, slab_ref[ROW_W1:ROW_W1 + NUM_INPUTS, 0:HIDDEN],
                          preferred_element_type=f32)
                  + slab_ref[ROW_B1:ROW_B1 + 1, 0:HIDDEN])
    h2 = jnp.tanh(jnp.dot(h1, slab_ref[ROW_W2:ROW_W2 + HIDDEN, 0:HIDDEN],
                          preferred_element_type=f32)
                  + slab_ref[ROW_B2:ROW_B2 + 1, 0:HIDDEN])
    mu = jnp.tanh(jnp.dot(h2, slab_ref[ROW_WMU:ROW_WMU + HIDDEN, 0:NUM_OUTPUTS],
                          preferred_element_type=f32)
                  + slab_ref[ROW_BMU:ROW_BMU + 1, 0:NUM_OUTPUTS])
    out_ref[...] = mu


def pack_params(p):
    """One-time offline packing of every module parameter into two f32 slabs."""
    pn = {k: np.asarray(v, np.float32) for k, v in p.items()}
    conv_w = (pn["conv1_w"], pn["conv2_w"])      # (16, 2, 4) each
    conv_b = (pn["conv1_b"], pn["conv2_b"])      # (16,)
    out_w = (pn["out1_w"], pn["out2_w"])         # (16, 48)
    out_b = (pn["out1_b"], pn["out2_b"])         # (16,)

    # Conv1d folded into a Toeplitz-style matmul weight on the raw (2, 16)
    # conv-fed slice of the input.  Column block [0,256): taps for input row 0
    # (channel 0); [256,512): row 1.  Within a block the 192 used columns are
    # [b1 even-t | b2 even-t | b1 odd-t | b2 odd-t], each 3*16 wide, index
    # (t//2)*16 + oc, so MaxPool1d(2) becomes a single max of two 96-wide halves.
    wc = np.zeros((CONV_IN, 2 * CONV_BLOCK), np.float32)
    for b in range(2):                    # branch (inputs[:, 0:8] / [:, 8:16])
        for ic in range(2):               # conv input channel == input row
            for t in range(6):            # t=6 is dropped by the pool
                for k in range(4):
                    l = t + k - 1         # padding = 1
                    if 0 <= l < 8:
                        lane = b * 8 + l
                        col = (ic * CONV_BLOCK + (96 if t % 2 else 0)
                               + b * 48 + (t // 2) * 16)
                        wc[lane, col:col + 16] += conv_w[b][:, ic, k]

    # Conv bias in post-pool form: only depends on (branch, pooled position, oc).
    bias96 = np.zeros((POOL_COLS,), np.float32)
    for b in range(2):
        for tp in range(3):
            base = b * 48 + tp * 16
            bias96[base:base + 16] = conv_b[b]

    # Both Linear(48,16) heads as one block-diagonal (96, 40) weight.  Rows
    # follow the pooled layout (branch*48 + p*16 + oc); columns already encode
    # the cnn.view(2,8) + cat(...) layout: [x_row0(20) | x_row1(20)].
    wo = np.zeros((96, OUTY_COLS), np.float32)
    for b in range(2):
        for oc in range(16):
            for pp in range(3):
                r = b * 48 + pp * 16 + oc
                src = out_w[b][:, oc * 3 + pp]                 # over output feat
                wo[r, b * 8:b * 8 + 8] = src[0:8]              # -> x[0, b*8:b*8+8]
                wo[r, NUM_INPUTS + b * 8:NUM_INPUTS + b * 8 + 8] = src[8:16]
    bo = np.zeros((OUTY_COLS,), np.float32)
    bo[0:8] = out_b[0][0:8]
    bo[8:16] = out_b[1][0:8]
    bo[NUM_INPUTS:NUM_INPUTS + 8] = out_b[0][8:16]
    bo[NUM_INPUTS + 8:NUM_INPUTS + 16] = out_b[1][8:16]

    # Fold bn0's affine into linear1:  ((d*rsqrt)*gamma + beta) @ W1^T + b1
    #   == (d*rsqrt) @ (diag(gamma) @ W1^T)  +  (b1 + W1 @ beta).
    w1_folded = pn["bn0_gamma"][:, None] * pn["lin1_w"].T          # (20, 32)
    b1_folded = pn["lin1_b"] + pn["lin1_w"] @ pn["bn0_beta"]       # (32,)

    slab = np.zeros((SLAB_ROWS, SLAB_COLS), np.float32)
    slab[ROW_BCONV, :POOL_COLS] = bias96
    slab[ROW_BOUT, :OUTY_COLS] = bo
    slab[ROW_B1, :HIDDEN] = b1_folded
    slab[ROW_B2, :HIDDEN] = pn["lin2_b"]
    slab[ROW_BMU, :NUM_OUTPUTS] = pn["mu_b"]
    slab[ROW_WOUT:ROW_WOUT + 96, :OUTY_COLS] = wo
    slab[ROW_W1:ROW_W1 + NUM_INPUTS, :HIDDEN] = w1_folded
    slab[ROW_W2:ROW_W2 + HIDDEN, :HIDDEN] = pn["lin2_w"].T
    slab[ROW_WMU:ROW_WMU + HIDDEN, :NUM_OUTPUTS] = pn["mu_w"].T
    return jnp.asarray(wc), jnp.asarray(slab)


def actor_forward(inputs, wconv, slab):
    assert inputs.shape == (BATCH, NUM_INPUTS)
    return pl.pallas_call(
        actor_kernel,
        out_shape=jax.ShapeDtypeStruct((BATCH, NUM_OUTPUTS), jnp.float32),
        in_specs=[pl.BlockSpec(memory_space=pltpu.MemorySpace.VMEM)] * 3,
        out_specs=pl.BlockSpec(memory_space=pltpu.MemorySpace.VMEM),
    )(inputs, wconv, slab)


def actor_reference(inputs, p):
    """Pure-JAX reference with PyTorch semantics, used to validate the kernel."""
    def branch(seg, wc, bc, wo, bo):
        x = seg.reshape(1, 2, 8)
        c = jax.lax.conv_general_dilated(
            x, wc, window_strides=(1,), padding=[(1, 1)],
            dimension_numbers=("NCH", "OIH", "NCH")) + bc[None, :, None]
        r = jnp.maximum(c, 0.0)                                     # (1, 16, 7)
        pool = jnp.max(r[:, :, :6].reshape(1, 16, 3, 2), axis=-1)   # (1, 16, 3)
        flat = pool.reshape(1, 48)
        return (flat @ wo.T + bo[None, :]).reshape(2, 8)

    c1 = branch(inputs[:, 0:8], p["conv1_w"], p["conv1_b"], p["out1_w"], p["out1_b"])
    c2 = branch(inputs[:, 8:16], p["conv2_w"], p["conv2_b"], p["out2_w"], p["out2_b"])
    x = jnp.concatenate([c1, c2, inputs[:, 16:]], axis=1)
    mean = x.mean(axis=0, keepdims=True)
    var = ((x - mean) ** 2).mean(axis=0, keepdims=True)
    x = (x - mean) / jnp.sqrt(var + BN_EPS) * p["bn0_gamma"][None, :] + p["bn0_beta"][None, :]
    h1 = jnp.tanh(x @ p["lin1_w"].T + p["lin1_b"][None, :])
    h2 = jnp.tanh(h1 @ p["lin2_w"].T + p["lin2_b"][None, :])
    return jnp.tanh(h2 @ p["mu_w"].T + p["mu_b"][None, :])


def init_params(key):
    keys = jax.random.split(key, 16)

    def uniform(k, shape, fan_in):
        bound = 1.0 / np.sqrt(fan_in)
        return jax.random.uniform(k, shape, jnp.float32, -bound, bound)

    p = {}
    p["conv1_w"] = uniform(keys[0], (16, 2, 4), 2 * 4)
    p["conv1_b"] = uniform(keys[1], (16,), 2 * 4)
    p["conv2_w"] = uniform(keys[2], (16, 2, 4), 2 * 4)
    p["conv2_b"] = uniform(keys[3], (16,), 2 * 4)
    p["out1_w"] = uniform(keys[4], (16, 48), 48)
    p["out1_b"] = uniform(keys[5], (16,), 48)
    p["out2_w"] = uniform(keys[6], (16, 48), 48)
    p["out2_b"] = uniform(keys[7], (16,), 48)
    p["bn0_gamma"] = jnp.ones((NUM_INPUTS,), jnp.float32)   # bn0.weight.fill_(1)
    p["bn0_beta"] = jnp.zeros((NUM_INPUTS,), jnp.float32)   # bn0.bias.fill_(0)
    p["lin1_w"] = uniform(keys[8], (HIDDEN, NUM_INPUTS), NUM_INPUTS)
    p["lin1_b"] = uniform(keys[9], (HIDDEN,), NUM_INPUTS)
    p["lin2_w"] = uniform(keys[10], (HIDDEN, HIDDEN), HIDDEN)
    p["lin2_b"] = uniform(keys[11], (HIDDEN,), HIDDEN)
    p["mu_w"] = uniform(keys[12], (NUM_OUTPUTS, HIDDEN), HIDDEN) * 0.1  # mu.weight.mul_(0.1)
    p["mu_b"] = uniform(keys[13], (NUM_OUTPUTS,), HIDDEN) * 0.1         # mu.bias.mul_(0.1)
    return p


if __name__ == "__main__":
    key = jax.random.PRNGKey(0)
    pkey, xkey = jax.random.split(key)
    params = init_params(pkey)

    # The freshly-constructed module has bn0 gamma=1 / beta=0; perturb them here
    # so the test also exercises the offline gamma/beta -> linear1 folding with
    # non-trivial (i.e. "trained") values.  The reference applies them generically.
    gkey, bkey = jax.random.split(jax.random.PRNGKey(1))
    params["bn0_gamma"] = 1.0 + 0.1 * jax.random.normal(gkey, (NUM_INPUTS,), jnp.float32)
    params["bn0_beta"] = 0.1 * jax.random.normal(bkey, (NUM_INPUTS,), jnp.float32)

    inputs = jax.random.normal(xkey, (BATCH, NUM_INPUTS), jnp.float32)

    wconv, slab = pack_params(params)          # one-time offline packing
    fwd = jax.jit(actor_forward)
    out = jax.block_until_ready(fwd(inputs, wconv, slab))
    ref = jax.block_until_ready(actor_reference(inputs, params))

    assert out.shape == (BATCH, NUM_OUTPUTS), out.shape
    assert np.all(np.isfinite(np.asarray(out)))
    assert np.allclose(np.asarray(out), np.asarray(ref), atol=2e-3, rtol=2e-3), (
        f"kernel/reference mismatch:\n{out}\n{ref}")
    print("KERNEL_OK")
</pallas_src>

<mosaic_0001>
module attributes {stable_mosaic.version = 11 : i64} {
  func.func @actor_kernel(%arg0: memref<2x20xf32, #tpu.memory_space<vmem>>, %arg1: memref<16x512xf32, #tpu.memory_space<vmem>>, %arg2: memref<192x128xf32, #tpu.memory_space<vmem>>, %arg3: memref<2x4xf32, #tpu.memory_space<vmem>>) attributes {dimension_semantics = [], scalar_prefetch = 0 : i64, scratch_operands = 0 : i64, tpu.core_type = #tpu.core_type<tc>} {
    %c0 = arith.constant 0 : index
    %c0_0 = arith.constant 0 : index
    %0 = vector.load %arg0[%c0, %c0_0] : memref<2x20xf32, #tpu.memory_space<vmem>>, vector<2x20xf32>
    %1 = vector.extract_strided_slice %0 {offsets = [0, 0], sizes = [2, 16], strides = [1, 1]} : vector<2x20xf32> to vector<2x16xf32>
    %c0_1 = arith.constant 0 : index
    %c0_2 = arith.constant 0 : index
    %2 = vector.load %arg1[%c0_1, %c0_2] : memref<16x512xf32, #tpu.memory_space<vmem>>, vector<16x512xf32>
    %cst = arith.constant dense<0.000000e+00> : vector<2x512xf32>
    %3 = tpu.matmul %1, %2, %cst {dimension_numbers = #tpu.dot_dimension_numbers<[1], [0], [0], [1], [0, 0, 1, 1], [], []>} : vector<2x16xf32>, vector<16x512xf32>, vector<2x512xf32> -> vector<2x512xf32>
    %4 = vector.extract_strided_slice %3 {offsets = [0, 0], sizes = [1, 192], strides = [1, 1]} : vector<2x512xf32> to vector<1x192xf32>
    %5 = vector.extract_strided_slice %3 {offsets = [1, 256], sizes = [1, 192], strides = [1, 1]} : vector<2x512xf32> to vector<1x192xf32>
    %6 = arith.addf %4, %5 : vector<1x192xf32>
    %7 = vector.extract_strided_slice %6 {offsets = [0, 0], sizes = [1, 96], strides = [1, 1]} : vector<1x192xf32> to vector<1x96xf32>
    %8 = vector.extract_strided_slice %6 {offsets = [0, 96], sizes = [1, 96], strides = [1, 1]} : vector<1x192xf32> to vector<1x96xf32>
    %9 = arith.maximumf %7, %8 : vector<1x96xf32>
    %c0_3 = arith.constant 0 : index
    %c0_4 = arith.constant 0 : index
    %10 = vector.load %arg2[%c0_3, %c0_4] : memref<192x128xf32, #tpu.memory_space<vmem>>, vector<1x96xf32>
    %11 = arith.addf %9, %10 : vector<1x96xf32>
    %cst_5 = arith.constant 0.000000e+00 : f32
    %12 = vector.broadcast %cst_5 : f32 to vector<1x96xf32>
    %13 = arith.maximumf %11, %12 : vector<1x96xf32>
    %c8 = arith.constant 8 : index
    %c0_6 = arith.constant 0 : index
    %14 = vector.load %arg2[%c8, %c0_6] : memref<192x128xf32, #tpu.memory_space<vmem>>, vector<96x40xf32>
    %cst_7 = arith.constant dense<0.000000e+00> : vector<1x40xf32>
    %15 = tpu.matmul %13, %14, %cst_7 {dimension_numbers = #tpu.dot_dimension_numbers<[1], [0], [0], [1], [0, 0, 1, 1], [], []>} : vector<1x96xf32>, vector<96x40xf32>, vector<1x40xf32> -> vector<1x40xf32>
    %c1 = arith.constant 1 : index
    %c0_8 = arith.constant 0 : index
    %16 = vector.load %arg2[%c1, %c0_8] : memref<192x128xf32, #tpu.memory_space<vmem>>, vector<1x40xf32>
    %17 = arith.addf %15, %16 : vector<1x40xf32>
    %18 = tpu.iota {dimensions = array<i32: 0>} : vector<2x20xi32>
    %19 = tpu.iota {dimensions = array<i32: 1>} : vector<2x20xi32>
    %c0_i32 = arith.constant 0 : i32
    %20 = vector.broadcast %c0_i32 : i32 to vector<2x20xi32>
    %21 = arith.cmpi eq, %18, %20 : vector<2x20xi32>
    %22 = vector.extract_strided_slice %17 {offsets = [0, 0], sizes = [1, 20], strides = [1, 1]} : vector<1x40xf32> to vector<1x20xf32>
    %23 = vector.extract_strided_slice %17 {offsets = [0, 20], sizes = [1, 20], strides = [1, 1]} : vector<1x40xf32> to vector<1x20xf32>
    %24 = vector.shape_cast %22 : vector<1x20xf32> to vector<1x20xf32>
    %25 = vector.broadcast %24 : vector<1x20xf32> to vector<2x20xf32>
    %26 = vector.shape_cast %23 : vector<1x20xf32> to vector<1x20xf32>
    %27 = vector.broadcast %26 : vector<1x20xf32> to vector<2x20xf32>
    %28 = arith.select %21, %25, %27 : vector<2x20xi1>, vector<2x20xf32>
    %c16_i32 = arith.constant 16 : i32
    %29 = vector.broadcast %c16_i32 : i32 to vector<2x20xi32>
    %30 = arith.cmpi sge, %19, %29 : vector<2x20xi32>
    %cst_9 = arith.constant 0.000000e+00 : f32
    %31 = vector.broadcast %cst_9 : f32 to vector<2x20xf32>
    %32 = arith.select %30, %0, %31 : vector<2x20xi1>, vector<2x20xf32>
    %33 = arith.addf %28, %32 : vector<2x20xf32>
    %cst_10 = arith.constant dense<0.000000e+00> : vector<20xf32>
    %34 = vector.multi_reduction <add>, %33, %cst_10 [0] : vector<2x20xf32> to vector<20xf32>
    %35 = vector.shape_cast %34 : vector<20xf32> to vector<1x20xf32>
    %cst_11 = arith.constant 2.000000e+00 : f32
    %36 = vector.broadcast %cst_11 : f32 to vector<1x20xf32>
    %37 = arith.divf %35, %36 : vector<1x20xf32>
    %38 = vector.broadcast %37 : vector<1x20xf32> to vector<2x20xf32>
    %39 = arith.subf %33, %38 : vector<2x20xf32>
    %40 = arith.mulf %39, %39 : vector<2x20xf32>
    %cst_12 = arith.constant dense<0.000000e+00> : vector<20xf32>
    %41 = vector.multi_reduction <add>, %40, %cst_12 [0] : vector<2x20xf32> to vector<20xf32>
    %42 = vector.shape_cast %41 : vector<20xf32> to vector<1x20xf32>
    %cst_13 = arith.constant 2.000000e+00 : f32
    %43 = vector.broadcast %cst_13 : f32 to vector<1x20xf32>
    %44 = arith.divf %42, %43 : vector<1x20xf32>
    %cst_14 = arith.constant 9.99999974E-6 : f32
    %45 = vector.broadcast %cst_14 : f32 to vector<1x20xf32>
    %46 = arith.addf %44, %45 : vector<1x20xf32>
    %47 = math.rsqrt %46 : vector<1x20xf32>
    %48 = vector.broadcast %47 : vector<1x20xf32> to vector<2x20xf32>
    %49 = arith.mulf %39, %48 : vector<2x20xf32>
    %c104 = arith.constant 104 : index
    %c0_15 = arith.constant 0 : index
    %50 = vector.load %arg2[%c104, %c0_15] : memref<192x128xf32, #tpu.memory_space<vmem>>, vector<20x32xf32>
    %cst_16 = arith.constant dense<0.000000e+00> : vector<2x32xf32>
    %51 = tpu.matmul %49, %50, %cst_16 {dimension_numbers = #tpu.dot_dimension_numbers<[1], [0], [0], [1], [0, 0, 1, 1], [], []>} : vector<2x20xf32>, vector<20x32xf32>, vector<2x32xf32> -> vector<2x32xf32>
    %c2 = arith.constant 2 : index
    %c0_17 = arith.constant 0 : index
    %52 = vector.load %arg2[%c2, %c0_17] : memref<192x128xf32, #tpu.memory_space<vmem>>, vector<1x32xf32>
    %53 = vector.broadcast %52 : vector<1x32xf32> to vector<2x32xf32>
    %54 = arith.addf %51, %53 : vector<2x32xf32>
    %55 = math.tanh %54 : vector<2x32xf32>
    %c128 = arith.constant 128 : index
    %c0_18 = arith.constant 0 : index
    %56 = vector.load %arg2[%c128, %c0_18] : memref<192x128xf32, #tpu.memory_space<vmem>>, vector<32x32xf32>
    %cst_19 = arith.constant dense<0.000000e+00> : vector<2x32xf32>
    %57 = tpu.matmul %55, %56, %cst_19 {dimension_numbers = #tpu.dot_dimension_numbers<[1], [0], [0], [1], [0, 0, 1, 1], [], []>} : vector<2x32xf32>, vector<32x32xf32>, vector<2x32xf32> -> vector<2x32xf32>
    %c3 = arith.constant 3 : index
    %c0_20 = arith.constant 0 : index
    %58 = vector.load %arg2[%c3, %c0_20] : memref<192x128xf32, #tpu.memory_space<vmem>>, vector<1x32xf32>
    %59 = vector.broadcast %58 : vector<1x32xf32> to vector<2x32xf32>
    %60 = arith.addf %57, %59 : vector<2x32xf32>
    %61 = math.tanh %60 : vector<2x32xf32>
    %c160 = arith.constant 160 : index
    %c0_21 = arith.constant 0 : index
    %62 = vector.load %arg2[%c160, %c0_21] : memref<192x128xf32, #tpu.memory_space<vmem>>, vector<32x4xf32>
    %cst_22 = arith.constant dense<0.000000e+00> : vector<2x4xf32>
    %63 = tpu.matmul %61, %62, %cst_22 {dimension_numbers = #tpu.dot_dimension_numbers<[1], [0], [0], [1], [0, 0, 1, 1], [], []>} : vector<2x32xf32>, vector<32x4xf32>, vector<2x4xf32> -> vector<2x4xf32>
    %c4 = arith.constant 4 : index
    %c0_23 = arith.constant 0 : index
    %64 = vector.load %arg2[%c4, %c0_23] : memref<192x128xf32, #tpu.memory_space<vmem>>, vector<1x4xf32>
    %65 = vector.broadcast %64 : vector<1x4xf32> to vector<2x4xf32>
    %66 = arith.addf %63, %65 : vector<2x4xf32>
    %67 = math.tanh %66 : vector<2x4xf32>
    %c0_24 = arith.constant 0 : index
    %c0_25 = arith.constant 0 : index
    %68 = vector.load %arg3[%c0_24, %c0_25] : memref<2x4xf32, #tpu.memory_space<vmem>>, vector<2x4xf32>
    tpu.vector_store %arg3[%c0_24, %c0_25], %67 {strides = array<i32>} : memref<2x4xf32, #tpu.memory_space<vmem>>, vector<2x4xf32>,
    return
  }
}

</mosaic_0001>

<llo_original>
// kernel: actor_forward.1
$region0: #{actor_forward.1}
  #allocation0 [shape = 'u32[]', space=smem, size = 0x4, offset = 0x4, fixed_abs, tag = 'smem constant byte address 0x4 - core index']
  #allocation1 [shape = 'u32[144,128]{1,0:T(1,128)}', space=vmem, size = 0x12000, scoped, tag = 'internal scratch']
  %s0 = inlined_call_operand.hbm [shape: f32[2,20], index: 0, kind: input, shape index: {}]
  %s1 = inlined_call_operand.hbm [shape: f32[16,512], index: 1, kind: input, shape index: {}]
  %s2 = inlined_call_operand.hbm [shape: f32[192,128], index: 2, kind: input, shape index: {}]
  %s3 = inlined_call_operand.hbm [shape: f32[2,4], index: 3, kind: output, shape index: {}]
  %s4 = sld [smem:[#allocation0]]
  $region34: #{actor_forward.1} parent=0
    _
  %s6 = ssub.s32 1, %s4
  %s7 = scalar_select 0, %s6, %s4
  $region1: #{actor_forward.1} parent=0
    #allocation2 [shape = 'u8[1024]{0}', space=vmem, size = 0x400, scoped, tag = 'input window, operand 0, single buffered']
    #allocation3 [shape = 's32[1]{0}', space=sflag, size = 0x4, scoped, tag = 'scoped memory for actor_forward.1']
    #allocation4 [shape = 's32[1]{0}', space=sflag, size = 0x4, scoped, tag = 'scoped memory for actor_forward.1']
    #allocation5 [shape = 'u8[32768]{0}', space=vmem, size = 0x8000, scoped, tag = 'input window, operand 1, single buffered']
    #allocation6 [shape = 's32[1]{0}', space=sflag, size = 0x4, scoped, tag = 'scoped memory for actor_forward.1']
    #allocation7 [shape = 'u8[98304]{0}', space=vmem, size = 0x18000, scoped, tag = 'input window, operand 2, single buffered']
    #allocation8 [shape = 'u8[1024]{0}', space=vmem, size = 0x400, scoped, tag = 'output window, operand 0, single buffered']
    %8 = vsyncpa [#allocation3], 0
    %9 = vsyncpa [#allocation6], 0
    %10 = vsyncpa [#allocation4], 0
    // Predicated region
    $region2: #{actor_forward.1} parent=1 // pred_check
      _
    $region3: #{actor_forward.1} parent=1 // pred_check_branch
      %12 = sbr.rel (0) target = $region5
    $region4: #{actor_forward.1} parent=1 // pred_region
      %s14 = ssub.s32 32, 32
      %15 = vsyncadd [#allocation3], %s14
      %s17 = sshll.u32 [#allocation2], 4
      %s18 = int_to_ptr.vmem [resolvable:$true] %s17
      %20 = dma.hbm_to_vmem [thread:$0]  %s0, 32, %s18, [#allocation3]
    $region5: #{actor_forward.1} parent=1 // pred_fallthru
      _
    // Predicated region
    $region6: #{actor_forward.1} parent=1 // pred_check
      _
    $region7: #{actor_forward.1} parent=1 // pred_check_branch
      %22 = sbr.rel (0) target = $region9
    $region8: #{actor_forward.1} parent=1 // pred_region
      %s24 = ssub.s32 1024, 1024
      %25 = vsyncadd [#allocation6], %s24
      %s26 = sshll.u32 [#allocation5], 4
      %s27 = int_to_ptr.vmem [resolvable:$true] %s26
      %32 = dma.hbm_to_vmem [thread:$0]  %s1, 1024, %s27, [#allocation6], 512, 512, 32
    $region9: #{actor_forward.1} parent=1 // pred_fallthru
      _
    // Predicated region
    $region10: #{actor_forward.1} parent=1 // pred_check
      _
    $region11: #{actor_forward.1} parent=1 // pred_check_branch
      %34 = sbr.rel (0) target = $region13
    $region12: #{actor_forward.1} parent=1 // pred_region
      %s36 = ssub.s32 3072, 3072
      %37 = vsyncadd [#allocation6], %s36
      %s38 = sshll.u32 [#allocation7], 4
      %s39 = int_to_ptr.vmem [resolvable:$true] %s38
      %44 = dma.hbm_to_vmem [thread:$0]  %s2, 3072, %s39, [#allocation6], 128, 128, 8
    $region13: #{actor_forward.1} parent=1 // pred_fallthru
      _
    // Predicated region
    $region14: #{actor_forward.1} parent=1 // pred_check
      _
    $region15: #{actor_forward.1} parent=1 // pred_check_branch
      %46 = sbr.rel (0) target = $region17
    $region16: #{actor_forward.1} parent=1 // pred_region
      %47 = dma.done [#allocation3], 32
    $region17: #{actor_forward.1} parent=1 // pred_fallthru
      _
    // Predicated region
    $region18: #{actor_forward.1} parent=1 // pred_check
      _
    $region19: #{actor_forward.1} parent=1 // pred_check_branch
      %49 = sbr.rel (0) target = $region21
    $region20: #{actor_forward.1} parent=1 // pred_region
      %50 = dma.done [#allocation6], 1024
    $region21: #{actor_forward.1} parent=1 // pred_fallthru
      _
    // Predicated region
    $region22: #{actor_forward.1} parent=1 // pred_check
      _
    $region23: #{actor_forward.1} parent=1 // pred_check_branch
      %52 = sbr.rel (0) target = $region25
    $region24: #{actor_forward.1} parent=1 // pred_region
      %53 = dma.done [#allocation6], 3072
    $region25: #{actor_forward.1} parent=1 // pred_fallthru
      _
    %v54 = vld [vmem:[#allocation2] sm:$0x3]
    %v55 = vld [vmem:[#allocation5] sm:$0xff]
    %v56 = vld [vmem:[#allocation5 + $0x8] sm:$0xff]
    %v57 = vld [vmem:[#allocation5 + $0x10] sm:$0xff]
    %v58 = vld [vmem:[#allocation5 + $0x18] sm:$0xff]
    %v59 = vld [vmem:[#allocation5 + $0x20] sm:$0xff]
    %v60 = vld [vmem:[#allocation5 + $0x28] sm:$0xff]
    %v61 = vld [vmem:[#allocation5 + $0x30] sm:$0xff]
    %v62 = vld [vmem:[#allocation5 + $0x38] sm:$0xff]
    %vm63 = vcmask 130048
    %v65 = vsel %vm63, %v54, 0
    %67 = vmatprep.subr.mxu0 %v56
    %68 = vmatpush1.msra.mxu0 %v55
    %69 = vmatprep.subr.mxu0 %v60
    %70 = vmatpush1.msra.mxu0 %v59
    %71 = vmatprep.subr.mxu0 0.0
    %72 = vmatpush1.msra.mxu0 0.0
    %73 = vmatprep.subr.mxu0 0.0
    %74 = vmatpush1.msra.mxu0 0.0
    %75 = vmatprep.subr.mxu0 0.0
    %76 = vmatpush1.msra.mxu0 0.0
    %77 = vmatprep.subr.mxu0 0.0
    %78 = vmatpush1.msra.mxu0 0.0
    %79 = vmatprep.subr.mxu0 0.0
    %80 = vmatpush1.msra.mxu0 0.0
    %81 = vmatprep.subr.mxu0 0.0
    %82 = vmatpush1.msra.mxu0 0.0
    %83 = vmatprep.subr.mxu0 0.0
    %84 = vmatpush1.msra.mxu0 0.0
    %85 = vmatprep.subr.mxu0 0.0
    %86 = vmatpush1.msra.mxu0 0.0
    %87 = vmatprep.subr.mxu0 0.0
    %88 = vmatpush1.msra.mxu0 0.0
    %89 = vmatprep.subr.mxu0 0.0
    %90 = vmatpush1.msra.mxu0 0.0
    %91 = vmatprep.subr.mxu0 0.0
    %92 = vmatpush1.msra.mxu0 0.0
    %93 = vmatprep.subr.mxu0 0.0
    %94 = vmatpush1.msra.mxu0 0.0
    %95 = vmatprep.subr.mxu0 0.0
    %96 = vmatpush1.msra.mxu0 0.0
    %97 = vmatprep.subr.mxu0 0.0
    %98 = vmatpush1.msra.mxu0 0.0
    %99 = vmatprep.subr.mxu0 0.0
    %100 = vmatpush1.msra.mxu0 0.0
    %101 = vmatprep.subr.mxu0 0.0
    %102 = vmatpush1.msra.mxu0 0.0
    %103 = vmatprep.subr.mxu0 0.0
    %104 = vmatpush1.msra.mxu0 0.0
    %105 = vmatprep.subr.mxu0 0.0
    %106 = vmatpush1.msra.mxu0 0.0
    %107 = vmatprep.subr.mxu0 0.0
    %108 = vmatpush1.msra.mxu0 0.0
    %109 = vmatprep.subr.mxu0 0.0
    %110 = vmatpush1.msra.mxu0 0.0
    %111 = vmatprep.subr.mxu0 0.0
    %112 = vmatpush1.msra.mxu0 0.0
    %113 = vmatprep.subr.mxu0 0.0
    %114 = vmatpush1.msra.mxu0 0.0
    %115 = vmatprep.subr.mxu0 0.0
    %116 = vmatpush1.msra.mxu0 0.0
    %117 = vmatprep.subr.mxu0 0.0
    %118 = vmatpush1.msra.mxu0 0.0
    %119 = vmatprep.subr.mxu0 0.0
    %120 = vmatpush1.msra.mxu0 0.0
    %121 = vmatprep.subr.mxu0 0.0
    %122 = vmatpush1.msra.mxu0 0.0
    %123 = vmatprep.subr.mxu0 0.0
    %124 = vmatpush1.msra.mxu0 0.0
    %125 = vmatprep.subr.mxu0 0.0
    %126 = vmatpush1.msra.mxu0 0.0
    %127 = vmatprep.subr.mxu0 0.0
    %128 = vmatpush1.msra.mxu0 0.0
    %129 = vmatprep.subr.mxu0 0.0
    %130 = vmatpush1.msra.mxu0 0.0
    %131 = vmatprep.mubr.f32.mxu0 0.0
    %132 = vmatmul.mubr.f32.gmra.mrb[0].mxu0 %v65
    %v133 = vpop.f32.mrb[0].mxu0
    %v134 = vadd.f32 0.0, %v133
    %v135 = vpop.f32.mrb[0].mxu0
    %v136 = vadd.f32 0.0, %v135
    %137 = vdwg.mxu0
    %138 = vmatprep.subr.mxu0 %v58
    %139 = vmatpush1.msra.mxu0 %v57
    %140 = vmatprep.subr.mxu0 %v62
    %141 = vmatpush1.msra.mxu0 %v61
    %142 = vmatprep.subr.mxu0 0.0
    %143 = vmatpush1.msra.mxu0 0.0
    %144 = vmatprep.subr.mxu0 0.0
    %145 = vmatpush1.msra.mxu0 0.0
    %146 = vmatprep.subr.mxu0 0.0
    %147 = vmatpush1.msra.mxu0 0.0
    %148 = vmatprep.subr.mxu0 0.0
    %149 = vmatpush1.msra.mxu0 0.0
    %150 = vmatprep.subr.mxu0 0.0
    %151 = vmatpush1.msra.mxu0 0.0
    %152 = vmatprep.subr.mxu0 0.0
    %153 = vmatpush1.msra.mxu0 0.0
    %154 = vmatprep.subr.mxu0 0.0
    %155 = vmatpush1.msra.mxu0 0.0
    %156 = vmatprep.subr.mxu0 0.0
    %157 = vmatpush1.msra.mxu0 0.0
    %158 = vmatprep.subr.mxu0 0.0
    %159 = vmatpush1.msra.mxu0 0.0
    %160 = vmatprep.subr.mxu0 0.0
    %161 = vmatpush1.msra.mxu0 0.0
    %162 = vmatprep.subr.mxu0 0.0
    %163 = vmatpush1.msra.mxu0 0.0
    %164 = vmatprep.subr.mxu0 0.0
    %165 = vmatpush1.msra.mxu0 0.0
    %166 = vmatprep.subr.mxu0 0.0
    %167 = vmatpush1.msra.mxu0 0.0
    %168 = vmatprep.subr.mxu0 0.0
    %169 = vmatpush1.msra.mxu0 0.0
    %170 = vmatprep.subr.mxu0 0.0
    %171 = vmatpush1.msra.mxu0 0.0
    %172 = vmatprep.subr.mxu0 0.0
    %173 = vmatpush1.msra.mxu0 0.0
    %174 = vmatprep.subr.mxu0 0.0
    %175 = vmatpush1.msra.mxu0 0.0
    %176 = vmatprep.subr.mxu0 0.0
    %177 = vmatpush1.msra.mxu0 0.0
    %178 = vmatprep.subr.mxu0 0.0
    %179 = vmatpush1.msra.mxu0 0.0
    %180 = vmatprep.subr.mxu0 0.0
    %181 = vmatpush1.msra.mxu0 0.0
    %182 = vmatprep.subr.mxu0 0.0
    %183 = vmatpush1.msra.mxu0 0.0
    %184 = vmatprep.subr.mxu0 0.0
    %185 = vmatpush1.msra.mxu0 0.0
    %186 = vmatprep.subr.mxu0 0.0
    %187 = vmatpush1.msra.mxu0 0.0
    %188 = vmatprep.subr.mxu0 0.0
    %189 = vmatpush1.msra.mxu0 0.0
    %190 = vmatprep.subr.mxu0 0.0
    %191 = vmatpush1.msra.mxu0 0.0
    %192 = vmatprep.subr.mxu0 0.0
    %193 = vmatpush1.msra.mxu0 0.0
    %194 = vmatprep.subr.mxu0 0.0
    %195 = vmatpush1.msra.mxu0 0.0
    %196 = vmatprep.subr.mxu0 0.0
    %197 = vmatpush1.msra.mxu0 0.0
    %198 = vmatprep.subr.mxu0 0.0
    %199 = vmatpush1.msra.mxu0 0.0
    %200 = vmatprep.subr.mxu0 0.0
    %201 = vmatpush1.msra.mxu0 0.0
    %202 = vmatprep.mubr.f32.mxu0 0.0
    %203 = vmatmul.mubr.f32.gmra.mrb[0].mxu0 %v65
    %v204 = vpop.f32.mrb[0].mxu0
    %v205 = vadd.f32 0.0, %v204
    %v206 = vpop.f32.mrb[0].mxu0
    %v207 = vadd.f32 0.0, %v206
    %208 = vdwg.mxu0
    %v211 = vrot.slane %v205, 1
    %v212 = vrot.slane %v207, 1
    %v215 = vadd.f32 %v134, %v211
    %v216 = vadd.f32 %v136, %v212
    %219 = vrot.lane.b32.xlu0 %v215, 32
    %v220 = vpop.permute.xlu0 %219
    %221 = vrot.lane.b32.xlu0 %v216, 32
    %v222 = vpop.permute.xlu0 %221
    %vm223 = vcmask 261120
    %v224 = vsel %vm223, %v220, %v222
    %v226 = vmax.f32 %v215, %v224
    %v227 = vld [vmem:[#allocation7] sm:$0x1]
    %v228 = vadd.f32 %v226, %v227
    %v229 = vmax.f32 %v228, 0.0
    %v230 = vld [vmem:[#allocation7 + $0x8] sm:$0xff]
    %v231 = vld [vmem:[#allocation7 + $0x10] sm:$0xff]
    %v232 = vld [vmem:[#allocation7 + $0x18] sm:$0xff]
    %v233 = vld [vmem:[#allocation7 + $0x20] sm:$0xff]
    %v234 = vld [vmem:[#allocation7 + $0x28] sm:$0xff]
    %v235 = vld [vmem:[#allocation7 + $0x30] sm:$0xff]
    %v236 = vld [vmem:[#allocation7 + $0x38] sm:$0xff]
    %v237 = vld [vmem:[#allocation7 + $0x40] sm:$0xff]
    %v238 = vld [vmem:[#allocation7 + $0x48] sm:$0xff]
    %v239 = vld [vmem:[#allocation7 + $0x50] sm:$0xff]
    %v240 = vld [vmem:[#allocation7 + $0x58] sm:$0xff]
    %v241 = vld [vmem:[#allocation7 + $0x60] sm:$0xff]
    %v242 = vld [vmem:[#allocation7 + $0x1] sm:$0x1]
    %vm243 = vcmask 785408
    %v245 = vsel %vm243, %v229, 0
    %247 = vmatprep.subr.mxu0 0.0
    %248 = vmatpush1.msra.mxu0 %v230
    %249 = vmatprep.subr.mxu0 0.0
    %250 = vmatpush1.msra.mxu0 %v231
    %251 = vmatprep.subr.mxu0 0.0
    %252 = vmatpush1.msra.mxu0 %v232
    %253 = vmatprep.subr.mxu0 0.0
    %254 = vmatpush1.msra.mxu0 %v233
    %255 = vmatprep.subr.mxu0 0.0
    %256 = vmatpush1.msra.mxu0 %v234
    %257 = vmatprep.subr.mxu0 0.0
    %258 = vmatpush1.msra.mxu0 %v235
    %259 = vmatprep.subr.mxu0 0.0
    %260 = vmatpush1.msra.mxu0 %v236
    %261 = vmatprep.subr.mxu0 0.0
    %262 = vmatpush1.msra.mxu0 %v237
    %263 = vmatprep.subr.mxu0 0.0
    %264 = vmatpush1.msra.mxu0 %v238
    %265 = vmatprep.subr.mxu0 0.0
    %266 = vmatpush1.msra.mxu0 %v239
    %267 = vmatprep.subr.mxu0 0.0
    %268 = vmatpush1.msra.mxu0 %v240
    %269 = vmatprep.subr.mxu0 0.0
    %270 = vmatpush1.msra.mxu0 %v241
    %271 = vmatprep.subr.mxu0 0.0
    %272 = vmatpush1.msra.mxu0 0.0
    %273 = vmatprep.subr.mxu0 0.0
    %274 = vmatpush1.msra.mxu0 0.0
    %275 = vmatprep.subr.mxu0 0.0
    %276 = vmatpush1.msra.mxu0 0.0
    %277 = vmatprep.subr.mxu0 0.0
    %278 = vmatpush1.msra.mxu0 0.0
    %279 = vmatprep.subr.mxu0 0.0
    %280 = vmatpush1.msra.mxu0 0.0
    %281 = vmatprep.subr.mxu0 0.0
    %282 = vmatpush1.msra.mxu0 0.0
    %283 = vmatprep.subr.mxu0 0.0
    %284 = vmatpush1.msra.mxu0 0.0
    %285 = vmatprep.subr.mxu0 0.0
    %286 = vmatpush1.msra.mxu0 0.0
    %287 = vmatprep.subr.mxu0 0.0
    %288 = vmatpush1.msra.mxu0 0.0
    %289 = vmatprep.subr.mxu0 0.0
    %290 = vmatpush1.msra.mxu0 0.0
    %291 = vmatprep.subr.mxu0 0.0
    %292 = vmatpush1.msra.mxu0 0.0
    %293 = vmatprep.subr.mxu0 0.0
    %294 = vmatpush1.msra.mxu0 0.0
    %295 = vmatprep.subr.mxu0 0.0
    %296 = vmatpush1.msra.mxu0 0.0
    %297 = vmatprep.subr.mxu0 0.0
    %298 = vmatpush1.msra.mxu0 0.0
    %299 = vmatprep.subr.mxu0 0.0
    %300 = vmatpush1.msra.mxu0 0.0
    %301 = vmatprep.subr.mxu0 0.0
    %302 = vmatpush1.msra.mxu0 0.0
    %303 = vmatprep.subr.mxu0 0.0
    %304 = vmatpush1.msra.mxu0 0.0
    %305 = vmatprep.subr.mxu0 0.0
    %306 = vmatpush1.msra.mxu0 0.0
    %307 = vmatprep.subr.mxu0 0.0
    %308 = vmatpush1.msra.mxu0 0.0
    %309 = vmatprep.subr.mxu0 0.0
    %310 = vmatpush1.msra.mxu0 0.0
    %311 = vmatprep.mubr.f32.mxu0 0.0
    %312 = vmatmul.mubr.f32.gmra.mrb[0].mxu0 %v245
    %v313 = vpop.f32.mrb[0].mxu0
    %v314 = vadd.f32 %v242, %v313
    %v315 = vpop.f32.mrb[0].mxu0
    %316 = vdwg.mxu0
    %v317 = vlaneseq
    %v318 = vshrl.u32 %v317, 7
    %v319 = vlaneseq
    %v320 = vand.u32 %v319, 127
    %vm321 = vcmp.eq.s32.totalorder %v318, 0
    %v322 = vlaneseq
    %v323 = vshrl.u32 %v322, 7
    %v324 = vsub.s32 0, %v323
    %v325 = vrot.slane %v314, %v324
    %327 = vrot.lane.b32.xlu0 %v325, 108
    %v328 = vpop.permute.xlu0 %327
    %v330 = vsel %vm321, %v325, %v328
    %vm331 = vcmp.ge.s32.totalorder %v320, 16
    %v332 = vsel %vm331, %v54, 0.0
    %v333 = vadd.f32 %v330, %v332
    %vm334 = vcmask 156672
    %v335 = vsel %vm334, %v333, 0.0
    %v336 = vrot.slane %v335, 4
    %v337 = vadd.f32 %v335, %v336
    %v338 = vrot.slane %v337, 2
    %v339 = vadd.f32 %v337, %v338
    %v340 = vrot.slane %v339, 1
    %v341 = vadd.f32 %v339, %v340
    %v342 = vrcp.pop 2.0
    %v343 = vmul.f32 %v341, %v342
    %v344 = vsub.f32 %v333, %v343
    %v345 = vmul.f32 %v344, %v344
    %v346 = vsel %vm334, %v345, 0.0
    %v347 = vrot.slane %v346, 4
    %v348 = vadd.f32 %v346, %v347
    %v349 = vrot.slane %v348, 2
    %v350 = vadd.f32 %v348, %v349
    %v351 = vrot.slane %v350, 1
    %v352 = vadd.f32 %v350, %v351
    %v353 = vmul.f32 %v352, %v342
    %v354 = vadd.f32 %v353, 1e-05
    %v355 = vrsqrt.pop %v354
    %v356 = vmul.f32 %v344, %v355
    %v357 = vld [vmem:[#allocation7 + $0x68] sm:$0xff]
    %v358 = vld [vmem:[#allocation7 + $0x70] sm:$0xff]
    %v359 = vld [vmem:[#allocation7 + $0x78] sm:$0xf]
    %v360 = vld [vmem:[#allocation7 + $0x2] sm:$0x1]
    %v361 = vlaneseq
    %v362 = vshrl.u32 %v361, 7
    %v363 = vsub.s32 0, %v362
    %v364 = vrot.slane %v360, %v363
    %vm365 = vcmask 162816
    %v367 = vsel %vm365, %v356, 0
    %vm369 = vcmask 1043456
    %v371 = vsel %vm369, %v359, 0
    %373 = vmatprep.subr.mxu0 0.0
    %374 = vmatpush1.msra.mxu0 %v357
    %375 = vmatprep.subr.mxu0 0.0
    %376 = vmatpush1.msra.mxu0 %v358
    %377 = vmatprep.subr.mxu0 0.0
    %378 = vmatpush1.msra.mxu0 %v371
    %379 = vmatprep.subr.mxu0 0.0
    %380 = vmatpush1.msra.mxu0 0.0
    %381 = vmatprep.subr.mxu0 0.0
    %382 = vmatpush1.msra.mxu0 0.0
    %383 = vmatprep.subr.mxu0 0.0
    %384 = vmatpush1.msra.mxu0 0.0
    %385 = vmatprep.subr.mxu0 0.0
    %386 = vmatpush1.msra.mxu0 0.0
    %387 = vmatprep.subr.mxu0 0.0
    %388 = vmatpush1.msra.mxu0 0.0
    %389 = vmatprep.subr.mxu0 0.0
    %390 = vmatpush1.msra.mxu0 0.0
    %391 = vmatprep.subr.mxu0 0.0
    %392 = vmatpush1.msra.mxu0 0.0
    %393 = vmatprep.subr.mxu0 0.0
    %394 = vmatpush1.msra.mxu0 0.0
    %395 = vmatprep.subr.mxu0 0.0
    %396 = vmatpush1.msra.mxu0 0.0
    %397 = vmatprep.subr.mxu0 0.0
    %398 = vmatpush1.msra.mxu0 0.0
    %399 = vmatprep.subr.mxu0 0.0
    %400 = vmatpush1.msra.mxu0 0.0
    %401 = vmatprep.subr.mxu0 0.0
    %402 = vmatpush1.msra.mxu0 0.0
    %403 = vmatprep.subr.mxu0 0.0
    %404 = vmatpush1.msra.mxu0 0.0
    %405 = vmatprep.subr.mxu0 0.0
    %406 = vmatpush1.msra.mxu0 0.0
    %407 = vmatprep.subr.mxu0 0.0
    %408 = vmatpush1.msra.mxu0 0.0
    %409 = vmatprep.subr.mxu0 0.0
    %410 = vmatpush1.msra.mxu0 0.0
    %411 = vmatprep.subr.mxu0 0.0
    %412 = vmatpush1.msra.mxu0 0.0
    %413 = vmatprep.subr.mxu0 0.0
    %414 = vmatpush1.msra.mxu0 0.0
    %415 = vmatprep.subr.mxu0 0.0
    %416 = vmatpush1.msra.mxu0 0.0
    %417 = vmatprep.subr.mxu0 0.0
    %418 = vmatpush1.msra.mxu0 0.0
    %419 = vmatprep.subr.mxu0 0.0
    %420 = vmatpush1.msra.mxu0 0.0
    %421 = vmatprep.subr.mxu0 0.0
    %422 = vmatpush1.msra.mxu0 0.0
    %423 = vmatprep.subr.mxu0 0.0
    %424 = vmatpush1.msra.mxu0 0.0
    %425 = vmatprep.subr.mxu0 0.0
    %426 = vmatpush1.msra.mxu0 0.0
    %427 = vmatprep.subr.mxu0 0.0
    %428 = vmatpush1.msra.mxu0 0.0
    %429 = vmatprep.subr.mxu0 0.0
    %430 = vmatpush1.msra.mxu0 0.0
    %431 = vmatprep.subr.mxu0 0.0
    %432 = vmatpush1.msra.mxu0 0.0
    %433 = vmatprep.subr.mxu0 0.0
    %434 = vmatpush1.msra.mxu0 0.0
    %435 = vmatprep.subr.mxu0 0.0
    %436 = vmatpush1.msra.mxu0 0.0
    %437 = vmatprep.mubr.f32.mxu0 0.0
    %438 = vmatmul.mubr.f32.gmra.mrb[0].mxu0 %v367
    %v439 = vpop.f32.mrb[0].mxu0
    %v440 = vadd.f32 %v364, %v439
    %v441 = vpop.f32.mrb[0].mxu0
    %442 = vdwg.mxu0
    %v443 = vtanh.pop %v440
    %v444 = vld [vmem:[#allocation7 + $0x80] sm:$0xff]
    %v445 = vld [vmem:[#allocation7 + $0x88] sm:$0xff]
    %v446 = vld [vmem:[#allocation7 + $0x90] sm:$0xff]
    %v447 = vld [vmem:[#allocation7 + $0x98] sm:$0xff]
    %v448 = vld [vmem:[#allocation7 + $0x3] sm:$0x1]
    %v449 = vlaneseq
    %v450 = vshrl.u32 %v449, 7
    %v451 = vsub.s32 0, %v450
    %v452 = vrot.slane %v448, %v451
    %v454 = vsel %vm223, %v443, 0
    %456 = vmatprep.subr.mxu0 0.0
    %457 = vmatpush1.msra.mxu0 %v444
    %458 = vmatprep.subr.mxu0 0.0
    %459 = vmatpush1.msra.mxu0 %v445
    %460 = vmatprep.subr.mxu0 0.0
    %461 = vmatpush1.msra.mxu0 %v446
    %462 = vmatprep.subr.mxu0 0.0
    %463 = vmatpush1.msra.mxu0 %v447
    %464 = vmatprep.subr.mxu0 0.0
    %465 = vmatpush1.msra.mxu0 0.0
    %466 = vmatprep.subr.mxu0 0.0
    %467 = vmatpush1.msra.mxu0 0.0
    %468 = vmatprep.subr.mxu0 0.0
    %469 = vmatpush1.msra.mxu0 0.0
    %470 = vmatprep.subr.mxu0 0.0
    %471 = vmatpush1.msra.mxu0 0.0
    %472 = vmatprep.subr.mxu0 0.0
    %473 = vmatpush1.msra.mxu0 0.0
    %474 = vmatprep.subr.mxu0 0.0
    %475 = vmatpush1.msra.mxu0 0.0
    %476 = vmatprep.subr.mxu0 0.0
    %477 = vmatpush1.msra.mxu0 0.0
    %478 = vmatprep.subr.mxu0 0.0
    %479 = vmatpush1.msra.mxu0 0.0
    %480 = vmatprep.subr.mxu0 0.0
    %481 = vmatpush1.msra.mxu0 0.0
    %482 = vmatprep.subr.mxu0 0.0
    %483 = vmatpush1.msra.mxu0 0.0
    %484 = vmatprep.subr.mxu0 0.0
    %485 = vmatpush1.msra.mxu0 0.0
    %486 = vmatprep.subr.mxu0 0.0
    %487 = vmatpush1.msra.mxu0 0.0
    %488 = vmatprep.subr.mxu0 0.0
    %489 = vmatpush1.msra.mxu0 0.0
    %490 = vmatprep.subr.mxu0 0.0
    %491 = vmatpush1.msra.mxu0 0.0
    %492 = vmatprep.subr.mxu0 0.0
    %493 = vmatpush1.msra.mxu0 0.0
    %494 = vmatprep.subr.mxu0 0.0
    %495 = vmatpush1.msra.mxu0 0.0
    %496 = vmatprep.subr.mxu0 0.0
    %497 = vmatpush1.msra.mxu0 0.0
    %498 = vmatprep.subr.mxu0 0.0
    %499 = vmatpush1.msra.mxu0 0.0
    %500 = vmatprep.subr.mxu0 0.0
    %501 = vmatpush1.msra.mxu0 0.0
    %502 = vmatprep.subr.mxu0 0.0
    %503 = vmatpush1.msra.mxu0 0.0
    %504 = vmatprep.subr.mxu0 0.0
    %505 = vmatpush1.msra.mxu0 0.0
    %506 = vmatprep.subr.mxu0 0.0
    %507 = vmatpush1.msra.mxu0 0.0
    %508 = vmatprep.subr.mxu0 0.0
    %509 = vmatpush1.msra.mxu0 0.0
    %510 = vmatprep.subr.mxu0 0.0
    %511 = vmatpush1.msra.mxu0 0.0
    %512 = vmatprep.subr.mxu0 0.0
    %513 = vmatpush1.msra.mxu0 0.0
    %514 = vmatprep.subr.mxu0 0.0
    %515 = vmatpush1.msra.mxu0 0.0
    %516 = vmatprep.subr.mxu0 0.0
    %517 = vmatpush1.msra.mxu0 0.0
    %518 = vmatprep.subr.mxu0 0.0
    %519 = vmatpush1.msra.mxu0 0.0
    %520 = vmatprep.mubr.f32.mxu0 0.0
    %521 = vmatmul.mubr.f32.gmra.mrb[0].mxu0 %v454
    %v522 = vpop.f32.mrb[0].mxu0
    %v523 = vadd.f32 %v452, %v522
    %v524 = vpop.f32.mrb[0].mxu0
    %525 = vdwg.mxu0
    %v526 = vtanh.pop %v523
    %v527 = vld [vmem:[#allocation7 + $0xa0] sm:$0xff]
    %v528 = vld [vmem:[#allocation7 + $0xa8] sm:$0xff]
    %v529 = vld [vmem:[#allocation7 + $0xb0] sm:$0xff]
    %v530 = vld [vmem:[#allocation7 + $0xb8] sm:$0xff]
    %v531 = vld [vmem:[#allocation7 + $0x4] sm:$0x1]
    %v532 = vlaneseq
    %v533 = vshrl.u32 %v532, 7
    %v534 = vsub.s32 0, %v533
    %v535 = vrot.slane %v531, %v534
    %v537 = vsel %vm223, %v526, 0
    %539 = vmatprep.subr.mxu0 0.0
    %540 = vmatpush1.msra.mxu0 %v527
    %541 = vmatprep.subr.mxu0 0.0
    %542 = vmatpush1.msra.mxu0 %v528
    %543 = vmatprep.subr.mxu0 0.0
    %544 = vmatpush1.msra.mxu0 %v529
    %545 = vmatprep.subr.mxu0 0.0
    %546 = vmatpush1.msra.mxu0 %v530
    %547 = vmatprep.subr.mxu0 0.0
    %548 = vmatpush1.msra.mxu0 0.0
    %549 = vmatprep.subr.mxu0 0.0
    %550 = vmatpush1.msra.mxu0 0.0
    %551 = vmatprep.subr.mxu0 0.0
    %552 = vmatpush1.msra.mxu0 0.0
    %553 = vmatprep.subr.mxu0 0.0
    %554 = vmatpush1.msra.mxu0 0.0
    %555 = vmatprep.subr.mxu0 0.0
    %556 = vmatpush1.msra.mxu0 0.0
    %557 = vmatprep.subr.mxu0 0.0
    %558 = vmatpush1.msra.mxu0 0.0
    %559 = vmatprep.subr.mxu0 0.0
    %560 = vmatpush1.msra.mxu0 0.0
    %561 = vmatprep.subr.mxu0 0.0
    %562 = vmatpush1.msra.mxu0 0.0
    %563 = vmatprep.subr.mxu0 0.0
    %564 = vmatpush1.msra.mxu0 0.0
    %565 = vmatprep.subr.mxu0 0.0
    %566 = vmatpush1.msra.mxu0 0.0
    %567 = vmatprep.subr.mxu0 0.0
    %568 = vmatpush1.msra.mxu0 0.0
    %569 = vmatprep.subr.mxu0 0.0
    %570 = vmatpush1.msra.mxu0 0.0
    %571 = vmatprep.subr.mxu0 0.0
    %572 = vmatpush1.msra.mxu0 0.0
    %573 = vmatprep.subr.mxu0 0.0
    %574 = vmatpush1.msra.mxu0 0.0
    %575 = vmatprep.subr.mxu0 0.0
    %576 = vmatpush1.msra.mxu0 0.0
    %577 = vmatprep.subr.mxu0 0.0
    %578 = vmatpush1.msra.mxu0 0.0
    %579 = vmatprep.subr.mxu0 0.0
    %580 = vmatpush1.msra.mxu0 0.0
    %581 = vmatprep.subr.mxu0 0.0
    %582 = vmatpush1.msra.mxu0 0.0
    %583 = vmatprep.subr.mxu0 0.0
    %584 = vmatpush1.msra.mxu0 0.0
    %585 = vmatprep.subr.mxu0 0.0
    %586 = vmatpush1.msra.mxu0 0.0
    %587 = vmatprep.subr.mxu0 0.0
    %588 = vmatpush1.msra.mxu0 0.0
    %589 = vmatprep.subr.mxu0 0.0
    %590 = vmatpush1.msra.mxu0 0.0
    %591 = vmatprep.subr.mxu0 0.0
    %592 = vmatpush1.msra.mxu0 0.0
    %593 = vmatprep.subr.mxu0 0.0
    %594 = vmatpush1.msra.mxu0 0.0
    %595 = vmatprep.subr.mxu0 0.0
    %596 = vmatpush1.msra.mxu0 0.0
    %597 = vmatprep.subr.mxu0 0.0
    %598 = vmatpush1.msra.mxu0 0.0
    %599 = vmatprep.subr.mxu0 0.0
    %600 = vmatpush1.msra.mxu0 0.0
    %601 = vmatprep.subr.mxu0 0.0
    %602 = vmatpush1.msra.mxu0 0.0
    %603 = vmatprep.mubr.f32.mxu0 0.0
    %604 = vmatmul.mubr.f32.gmra.mrb[0].mxu0 %v537
    %v605 = vpop.f32.mrb[0].mxu0
    %v606 = vadd.f32 %v535, %v605
    %v607 = vpop.f32.mrb[0].mxu0
    %608 = vdwg.mxu0
    %v609 = vtanh.pop %v606
    %vm610 = vcmask 25600
    %611 = vst.msk [vmem:[#allocation8] sm:$0x3] %vm610, %v609
    // Predicated region
    $region26: #{actor_forward.1} parent=1 // pred_check
      _
    $region27: #{actor_forward.1} parent=1 // pred_check_branch
      %613 = sbr.rel (0) target = $region29
    $region28: #{actor_forward.1} parent=1 // pred_region
      %s615 = ssub.s32 32, 32
      %616 = vsyncadd [#allocation4], %s615
      %s618 = sshll.u32 [#allocation8], 4
      %s619 = int_to_ptr.vmem [resolvable:$true] %s618
      %621 = dma.vmem_to_hbm [thread:$0]  %s619, 32, %s3, [#allocation4]
    $region29: #{actor_forward.1} parent=1 // pred_fallthru
      _
    // Predicated region
    $region30: #{actor_forward.1} parent=1 // pred_check
      _
    $region31: #{actor_forward.1} parent=1 // pred_check_branch
      %623 = sbr.rel (0) target = $region33
    $region32: #{actor_forward.1} parent=1 // pred_region
      %624 = dma.done [#allocation4], 32
    $region33: #{actor_forward.1} parent=1 // pred_fallthru
      _
    %625 = vsyncpa [#allocation3], 1
    %626 = vsyncpa [#allocation6], 1
    %627 = vsyncpa [#allocation4], 1

</llo_original>
